<compile_context>
chip_gen: v6e
topology: v6e:2x2x1
jax: 0.10.0
libtpu: 0.0.40
codegen_flags: <defaults>
</compile_context>

<pallas_src>
import functools

import jax
import jax.numpy as jnp
from jax.experimental import pallas as pl
from jax.experimental.pallas import tpu as pltpu

LANE = 128          # vreg lane width: every feature dim is padded to this
SUBLANE = 8         # sublane alignment for the batch (second-to-last) dim
TARGET_TILE_B = 1024  # rows per grid step for large batches (amortizes step overhead)
NEG_BIG = -1e30     # output-bias padding so padded logits underflow to 0 under softmax


# ----------------------------- kernel -----------------------------------------

def mlp_kernel(x_ref, w1_ref, b1_ref, w2_ref, b2_ref, w3_ref, b3_ref, o_ref):
    # Hidden layer 1: bf16 MXU matmul, f32 accumulate; bias/ReLU on the VPU in f32.
    h = jnp.dot(x_ref[...], w1_ref[...], preferred_element_type=jnp.float32) + b1_ref[...]
    h = jnp.maximum(h, 0.0)
    # Hidden layer 2
    h = jnp.dot(h.astype(jnp.bfloat16), w2_ref[...],
                preferred_element_type=jnp.float32) + b2_ref[...]
    h = jnp.maximum(h, 0.0)
    # Output layer (padded lanes carry bias = -1e30 -> exp() underflows to exactly 0)
    logits = jnp.dot(h.astype(jnp.bfloat16), w3_ref[...],
                     preferred_element_type=jnp.float32) + b3_ref[...]
    # Softmax over the feature dim (PyTorch nn.Softmax() on 2-D input -> dim=1)
    m = jnp.max(logits, axis=-1, keepdims=True)
    e = jnp.exp(logits - m)
    denom = jnp.sum(e, axis=-1, keepdims=True)           # == sum over the 8 real lanes
    o_ref[...] = e * pl.reciprocal(denom, approx=False)  # exact: rows sum to 1 (f32)


# ----------------------------- wrapper -----------------------------------------

def _pad2d(a, rows, cols, fill=0.0, dtype=jnp.float32):
    out = jnp.full((rows, cols), fill, dtype=dtype)
    return out.at[: a.shape[0], : a.shape[1]].set(a.astype(dtype))


def prepare_params(params):
    """Pad + cast parameters ONCE (hoisted out of the per-forward path).

    Weights -> bf16 [128,128] (MXU-native, half the resident VMEM / HBM bytes),
    biases  -> f32  [1,128]; output-bias padding = -1e30 so softmax ignores fake lanes.
    """
    return {
        "w1": _pad2d(params["w1"], LANE, LANE, dtype=jnp.bfloat16),
        "b1": _pad2d(params["b1"], 1, LANE, dtype=jnp.float32),
        "w2": _pad2d(params["w2"], LANE, LANE, dtype=jnp.bfloat16),
        "b2": _pad2d(params["b2"], 1, LANE, dtype=jnp.float32),
        "w3": _pad2d(params["w3"], LANE, LANE, dtype=jnp.bfloat16),
        "b3": _pad2d(params["b3"], 1, LANE, fill=NEG_BIG, dtype=jnp.float32),
    }


def _num_tensorcores():
    """1 for single-TC chips (v5e/v6e), 2 for dual-TC v7x.  Heuristic on device_kind."""
    try:
        kind = jax.devices()[0].device_kind.lower()
    except Exception:
        return 1
    return 2 if ("v7" in kind or "7x" in kind) else 1


def _choose_batch_tiling(batch, n_cores):
    """Pick (B_pad, TILE_B, steps).

    - steps is a multiple of n_cores so a dual-TC v7x shards the 'parallel' axis evenly,
    - small batches on single-TC chips collapse to one fat step (no wasted step overhead),
    - large batches cap tiles at ~TARGET_TILE_B rows (VMEM is nowhere near a constraint).
    """
    b_al = pl.cdiv(batch, SUBLANE) * SUBLANE
    steps = max(n_cores, pl.cdiv(b_al, TARGET_TILE_B))
    steps = pl.cdiv(steps, n_cores) * n_cores
    tile = pl.cdiv(b_al, steps)
    tile = pl.cdiv(tile, SUBLANE) * SUBLANE
    return tile * steps, tile, steps


@functools.partial(jax.jit, static_argnames=("out_size", "n_cores"))
def _mlp_forward_impl(x, pp, *, out_size, n_cores):
    B = x.shape[0]
    b_pad, tile_b, steps = _choose_batch_tiling(B, n_cores)

    # Only the activation is padded per call (bf16 -> half the streamed input bytes).
    x_p = _pad2d(x, b_pad, LANE, dtype=jnp.bfloat16)

    batch_in_spec = pl.BlockSpec((tile_b, LANE), lambda i: (i, 0))   # tiled over batch
    batch_out_spec = pl.BlockSpec((tile_b, LANE), lambda i: (i, 0))
    resident_w = pl.BlockSpec((LANE, LANE), lambda i: (0, 0))        # weights stay in VMEM
    resident_b = pl.BlockSpec((1, LANE), lambda i: (0, 0))

    out_padded = pl.pallas_call(
        mlp_kernel,
        out_shape=jax.ShapeDtypeStruct((b_pad, LANE), jnp.float32),
        grid=(steps,),
        in_specs=[
            batch_in_spec,
            resident_w, resident_b,
            resident_w, resident_b,
            resident_w, resident_b,
        ],
        out_specs=batch_out_spec,
        compiler_params=pltpu.CompilerParams(
            dimension_semantics=("parallel",)),
    )(x_p, pp["w1"], pp["b1"], pp["w2"], pp["b2"], pp["w3"], pp["b3"])

    return out_padded[:B, :out_size]


def mlp_forward(x, padded_params, out_size):
    """x: [B, input_size] f32.  padded_params: output of prepare_params()."""
    return _mlp_forward_impl(x, padded_params, out_size=out_size,
                             n_cores=_num_tensorcores())


# ----------------------------- reference / test --------------------------------

def init_linear(key, in_size, out_size):
    """Deterministic init mimicking PyTorch nn.Linear default (uniform +/- 1/sqrt(in))."""
    kw, kb = jax.random.split(key)
    bound = 1.0 / (in_size ** 0.5)
    # stored as [in, out] (already transposed relative to PyTorch's [out, in])
    w = jax.random.uniform(kw, (in_size, out_size), jnp.float32, -bound, bound)
    b = jax.random.uniform(kb, (1, out_size), jnp.float32, -bound, bound)
    return w, b


def reference_forward(x, params):
    h = jnp.maximum(x @ params["w1"] + params["b1"], 0.0)
    h = jnp.maximum(h @ params["w2"] + params["b2"], 0.0)
    logits = h @ params["w3"] + params["b3"]
    return jax.nn.softmax(logits, axis=-1)


if __name__ == "__main__":
    # Config-derived sizes
    input_size = 16
    hidden_size = 32
    hidden_size_adaptation = 2.0
    output_size = 8
    batch = 256   # single fat step on v5e/v6e, 2 steps (1 per TC) on v7x

    hidden2 = int(hidden_size // hidden_size_adaptation)  # 16

    key = jax.random.PRNGKey(0)
    kx, k1, k2, k3 = jax.random.split(key, 4)

    x = jax.random.normal(kx, (batch, input_size), jnp.float32)

    w1, b1 = init_linear(k1, input_size, hidden_size)
    w2, b2 = init_linear(k2, hidden_size, hidden2)
    w3, b3 = init_linear(k3, hidden2, output_size)
    params = {"w1": w1, "b1": b1, "w2": w2, "b2": b2, "w3": w3, "b3": b3}

    # Pad/cast parameters ONCE (not on the per-forward path).
    padded_params = prepare_params(params)
    padded_params = jax.tree_util.tree_map(jax.block_until_ready, padded_params)

    out = mlp_forward(x, params=padded_params, out_size=output_size) \
        if False else mlp_forward(x, padded_params, output_size)
    out = jax.block_until_ready(out)

    ref = reference_forward(x, params)
    assert out.shape == (batch, output_size)
    # bf16 MXU operands limit agreement with the f32 reference to ~1e-2 absolute on the
    # softmax probabilities; accumulation and all VPU math are f32.
    assert jnp.allclose(out, ref, atol=2e-2, rtol=2e-2), "mismatch vs JAX reference"
    # Exact reciprocal -> rows sum to 1 up to f32 rounding.
    assert jnp.allclose(jnp.sum(out, axis=-1), 1.0, atol=1e-3), "softmax rows must sum to 1"

    print("KERNEL_OK")
</pallas_src>

<mosaic_0001>
module attributes {stable_mosaic.version = 11 : i64} {
  func.func @mlp_kernel(%arg0: i32, %arg1: memref<256x128xbf16, #tpu.memory_space<vmem>>, %arg2: memref<128x128xbf16, #tpu.memory_space<vmem>>, %arg3: memref<1x128xf32, #tpu.memory_space<vmem>>, %arg4: memref<128x128xbf16, #tpu.memory_space<vmem>>, %arg5: memref<1x128xf32, #tpu.memory_space<vmem>>, %arg6: memref<128x128xbf16, #tpu.memory_space<vmem>>, %arg7: memref<1x128xf32, #tpu.memory_space<vmem>>, %arg8: memref<256x128xf32, #tpu.memory_space<vmem>>) attributes {dimension_semantics = [#tpu.dimension_semantics<parallel>], iteration_bounds = array<i64: 1>, scalar_prefetch = 0 : i64, scratch_operands = 0 : i64, tpu.core_type = #tpu.core_type<tc>, window_params = [{transform_indices = @transform_0, window_bounds = array<i64: 256, 128>}, {pipeline_mode = #tpu.pipeline_mode<synchronous>, transform_indices = @transform_1, window_bounds = array<i64: 128, 128>}, {pipeline_mode = #tpu.pipeline_mode<synchronous>, transform_indices = @transform_2, window_bounds = array<i64: 1, 128>}, {pipeline_mode = #tpu.pipeline_mode<synchronous>, transform_indices = @transform_3, window_bounds = array<i64: 128, 128>}, {pipeline_mode = #tpu.pipeline_mode<synchronous>, transform_indices = @transform_4, window_bounds = array<i64: 1, 128>}, {pipeline_mode = #tpu.pipeline_mode<synchronous>, transform_indices = @transform_5, window_bounds = array<i64: 128, 128>}, {pipeline_mode = #tpu.pipeline_mode<synchronous>, transform_indices = @transform_6, window_bounds = array<i64: 1, 128>}, {transform_indices = @transform_7, window_bounds = array<i64: 256, 128>}]} {
    %c0 = arith.constant 0 : index
    %c0_0 = arith.constant 0 : index
    %0 = vector.load %arg1[%c0, %c0_0] : memref<256x128xbf16, #tpu.memory_space<vmem>>, vector<256x128xbf16>
    %c0_1 = arith.constant 0 : index
    %c0_2 = arith.constant 0 : index
    %1 = vector.load %arg2[%c0_1, %c0_2] : memref<128x128xbf16, #tpu.memory_space<vmem>>, vector<128x128xbf16>
    %cst = arith.constant dense<0.000000e+00> : vector<256x128xf32>
    %2 = tpu.matmul %0, %1, %cst {dimension_numbers = #tpu.dot_dimension_numbers<[1], [0], [0], [1], [0, 0, 1, 1], [], []>} : vector<256x128xbf16>, vector<128x128xbf16>, vector<256x128xf32> -> vector<256x128xf32>
    %c0_3 = arith.constant 0 : index
    %c0_4 = arith.constant 0 : index
    %3 = vector.load %arg3[%c0_3, %c0_4] : memref<1x128xf32, #tpu.memory_space<vmem>>, vector<1x128xf32>
    %4 = vector.broadcast %3 : vector<1x128xf32> to vector<256x128xf32>
    %5 = arith.addf %2, %4 : vector<256x128xf32>
    %cst_5 = arith.constant 0.000000e+00 : f32
    %6 = vector.broadcast %cst_5 : f32 to vector<256x128xf32>
    %7 = arith.maximumf %5, %6 : vector<256x128xf32>
    %8 = arith.truncf %7 : vector<256x128xf32> to vector<256x128xbf16>
    %c0_6 = arith.constant 0 : index
    %c0_7 = arith.constant 0 : index
    %9 = vector.load %arg4[%c0_6, %c0_7] : memref<128x128xbf16, #tpu.memory_space<vmem>>, vector<128x128xbf16>
    %cst_8 = arith.constant dense<0.000000e+00> : vector<256x128xf32>
    %10 = tpu.matmul %8, %9, %cst_8 {dimension_numbers = #tpu.dot_dimension_numbers<[1], [0], [0], [1], [0, 0, 1, 1], [], []>} : vector<256x128xbf16>, vector<128x128xbf16>, vector<256x128xf32> -> vector<256x128xf32>
    %c0_9 = arith.constant 0 : index
    %c0_10 = arith.constant 0 : index
    %11 = vector.load %arg5[%c0_9, %c0_10] : memref<1x128xf32, #tpu.memory_space<vmem>>, vector<1x128xf32>
    %12 = vector.broadcast %11 : vector<1x128xf32> to vector<256x128xf32>
    %13 = arith.addf %10, %12 : vector<256x128xf32>
    %cst_11 = arith.constant 0.000000e+00 : f32
    %14 = vector.broadcast %cst_11 : f32 to vector<256x128xf32>
    %15 = arith.maximumf %13, %14 : vector<256x128xf32>
    %16 = arith.truncf %15 : vector<256x128xf32> to vector<256x128xbf16>
    %c0_12 = arith.constant 0 : index
    %c0_13 = arith.constant 0 : index
    %17 = vector.load %arg6[%c0_12, %c0_13] : memref<128x128xbf16, #tpu.memory_space<vmem>>, vector<128x128xbf16>
    %cst_14 = arith.constant dense<0.000000e+00> : vector<256x128xf32>
    %18 = tpu.matmul %16, %17, %cst_14 {dimension_numbers = #tpu.dot_dimension_numbers<[1], [0], [0], [1], [0, 0, 1, 1], [], []>} : vector<256x128xbf16>, vector<128x128xbf16>, vector<256x128xf32> -> vector<256x128xf32>
    %c0_15 = arith.constant 0 : index
    %c0_16 = arith.constant 0 : index
    %19 = vector.load %arg7[%c0_15, %c0_16] : memref<1x128xf32, #tpu.memory_space<vmem>>, vector<1x128xf32>
    %20 = vector.broadcast %19 : vector<1x128xf32> to vector<256x128xf32>
    %21 = arith.addf %18, %20 : vector<256x128xf32>
    %cst_17 = arith.constant dense<0xFF800000> : vector<256xf32>
    %22 = vector.multi_reduction <maximumf>, %21, %cst_17 [1] : vector<256x128xf32> to vector<256xf32>
    %23 = vector.shape_cast %22 : vector<256xf32> to vector<256x1xf32>
    %24 = vector.broadcast %23 : vector<256x1xf32> to vector<256x128xf32>
    %25 = arith.subf %21, %24 : vector<256x128xf32>
    %26 = math.exp %25 : vector<256x128xf32>
    %cst_18 = arith.constant dense<0.000000e+00> : vector<256xf32>
    %27 = vector.multi_reduction <add>, %26, %cst_18 [1] : vector<256x128xf32> to vector<256xf32>
    %28 = vector.shape_cast %27 : vector<256xf32> to vector<256x1xf32>
    %29 = tpu.reciprocal %28 : vector<256x1xf32> -> vector<256x1xf32>
    %30 = vector.broadcast %29 : vector<256x1xf32> to vector<256x128xf32>
    %31 = arith.mulf %26, %30 : vector<256x128xf32>
    %c0_19 = arith.constant 0 : index
    %c0_20 = arith.constant 0 : index
    %32 = vector.load %arg8[%c0_19, %c0_20] : memref<256x128xf32, #tpu.memory_space<vmem>>, vector<256x128xf32>
    tpu.vector_store %arg8[%c0_19, %c0_20], %31 {strides = array<i32>} : memref<256x128xf32, #tpu.memory_space<vmem>>, vector<256x128xf32>,
    return
  }
  func.func @transform_0(%arg0: i32) -> (i32, i32) {
    %c0_i32 = arith.constant 0 : i32
    %c0_i32_0 = arith.constant 0 : i32
    return %arg0, %c0_i32 : i32, i32
  }
  func.func @transform_1(%arg0: i32) -> (i32, i32) {
    %c0_i32 = arith.constant 0 : i32
    %c0_i32_0 = arith.constant 0 : i32
    %c0_i32_1 = arith.constant 0 : i32
    return %c0_i32, %c0_i32_0 : i32, i32
  }
  func.func @transform_2(%arg0: i32) -> (i32, i32) {
    %c0_i32 = arith.constant 0 : i32
    %c0_i32_0 = arith.constant 0 : i32
    %c0_i32_1 = arith.constant 0 : i32
    return %c0_i32, %c0_i32_0 : i32, i32
  }
  func.func @transform_3(%arg0: i32) -> (i32, i32) {
    %c0_i32 = arith.constant 0 : i32
    %c0_i32_0 = arith.constant 0 : i32
    %c0_i32_1 = arith.constant 0 : i32
    return %c0_i32, %c0_i32_0 : i32, i32
  }
  func.func @transform_4(%arg0: i32) -> (i32, i32) {
    %c0_i32 = arith.constant 0 : i32
    %c0_i32_0 = arith.constant 0 : i32
    %c0_i32_1 = arith.constant 0 : i32
    return %c0_i32, %c0_i32_0 : i32, i32
  }
  func.func @transform_5(%arg0: i32) -> (i32, i32) {
    %c0_i32 = arith.constant 0 : i32
    %c0_i32_0 = arith.constant 0 : i32
    %c0_i32_1 = arith.constant 0 : i32
    return %c0_i32, %c0_i32_0 : i32, i32
  }
  func.func @transform_6(%arg0: i32) -> (i32, i32) {
    %c0_i32 = arith.constant 0 : i32
    %c0_i32_0 = arith.constant 0 : i32
    %c0_i32_1 = arith.constant 0 : i32
    return %c0_i32, %c0_i32_0 : i32, i32
  }
  func.func @transform_7(%arg0: i32) -> (i32, i32) {
    %c0_i32 = arith.constant 0 : i32
    %c0_i32_0 = arith.constant 0 : i32
    return %arg0, %c0_i32 : i32, i32
  }
}

</mosaic_0001>

<llo_original>
// kernel: _mlp_forward_impl.1
$region0: #{_mlp_forward_impl.1}
  #allocation0 [shape = 'u32[]', space=smem, size = 0x4, offset = 0x4, fixed_abs, tag = 'smem constant byte address 0x4 - core index']
  #allocation1 [shape = 'u32[144,128]{1,0:T(1,128)}', space=vmem, size = 0x12000, scoped, tag = 'internal scratch']
  %s0 = inlined_call_operand.vmem [shape: bf16[256,128], index: 0, kind: input, shape index: {}]
  %s1 = inlined_call_operand.vmem [shape: bf16[128,128], index: 1, kind: input, shape index: {}]
  %s2 = inlined_call_operand.vmem [shape: f32[1,128], index: 2, kind: input, shape index: {}]
  %s3 = inlined_call_operand.vmem [shape: bf16[128,128], index: 3, kind: input, shape index: {}]
  %s4 = inlined_call_operand.vmem [shape: f32[1,128], index: 4, kind: input, shape index: {}]
  %s5 = inlined_call_operand.vmem [shape: bf16[128,128], index: 5, kind: input, shape index: {}]
  %s6 = inlined_call_operand.vmem [shape: f32[1,128], index: 6, kind: input, shape index: {}]
  %s7 = inlined_call_operand.vmem [shape: f32[256,128], index: 7, kind: output, shape index: {}]
  %s8 = sld [smem:[#allocation0]]
  $region38: #{_mlp_forward_impl.1} parent=0
    _
  %s10 = ssub.s32 1, %s8
  %s11 = scalar_select 0, %s10, %s8
  // Predicated region
  $region2: #{_mlp_forward_impl.1} parent=0 // pred_check
    _
  $region3: #{_mlp_forward_impl.1} parent=0 // pred_check_branch
    %13 = sbr.rel (0) target = $region5
  $region4: #{_mlp_forward_impl.1} parent=0 // pred_region
    _
  $region5: #{_mlp_forward_impl.1} parent=0 // pred_fallthru
    _
  // Predicated region
  $region6: #{_mlp_forward_impl.1} parent=0 // pred_check
    _
  $region7: #{_mlp_forward_impl.1} parent=0 // pred_check_branch
    %15 = sbr.rel (0) target = $region9
  $region8: #{_mlp_forward_impl.1} parent=0 // pred_region
    _
  $region9: #{_mlp_forward_impl.1} parent=0 // pred_fallthru
    _
  // Predicated region
  $region10: #{_mlp_forward_impl.1} parent=0 // pred_check
    _
  $region11: #{_mlp_forward_impl.1} parent=0 // pred_check_branch
    %17 = sbr.rel (0) target = $region13
  $region12: #{_mlp_forward_impl.1} parent=0 // pred_region
    _
  $region13: #{_mlp_forward_impl.1} parent=0 // pred_fallthru
    _
  // Predicated region
  $region14: #{_mlp_forward_impl.1} parent=0 // pred_check
    _
  $region15: #{_mlp_forward_impl.1} parent=0 // pred_check_branch
    %19 = sbr.rel (0) target = $region17
  $region16: #{_mlp_forward_impl.1} parent=0 // pred_region
    _
  $region17: #{_mlp_forward_impl.1} parent=0 // pred_fallthru
    _
  // Predicated region
  $region18: #{_mlp_forward_impl.1} parent=0 // pred_check
    _
  $region19: #{_mlp_forward_impl.1} parent=0 // pred_check_branch
    %21 = sbr.rel (0) target = $region21
  $region20: #{_mlp_forward_impl.1} parent=0 // pred_region
    _
  $region21: #{_mlp_forward_impl.1} parent=0 // pred_fallthru
    _
  // Predicated region
  $region22: #{_mlp_forward_impl.1} parent=0 // pred_check
    _
  $region23: #{_mlp_forward_impl.1} parent=0 // pred_check_branch
    %23 = sbr.rel (0) target = $region25
  $region24: #{_mlp_forward_impl.1} parent=0 // pred_region
    _
  $region25: #{_mlp_forward_impl.1} parent=0 // pred_fallthru
    _
  // Predicated region
  $region26: #{_mlp_forward_impl.1} parent=0 // pred_check
    _
  $region27: #{_mlp_forward_impl.1} parent=0 // pred_check_branch
    %25 = sbr.rel (0) target = $region29
  $region28: #{_mlp_forward_impl.1} parent=0 // pred_region
    _
  $region29: #{_mlp_forward_impl.1} parent=0 // pred_fallthru
    _
  %v27 = vld [vmem:[%s0] sm:$0xf]
  %v28 = vld [vmem:[%s0 + $0x4] sm:$0xf]
  %v29 = vld [vmem:[%s0 + $0x8] sm:$0xf]
  %v30 = vld [vmem:[%s0 + $0xc] sm:$0xf]
  %v31 = vld [vmem:[%s0 + $0x10] sm:$0xf]
  %v32 = vld [vmem:[%s0 + $0x14] sm:$0xf]
  %v33 = vld [vmem:[%s0 + $0x18] sm:$0xf]
  %v34 = vld [vmem:[%s0 + $0x1c] sm:$0xf]
  %v35 = vld [vmem:[%s0 + $0x20] sm:$0xf]
  %v36 = vld [vmem:[%s0 + $0x24] sm:$0xf]
  %v37 = vld [vmem:[%s0 + $0x28] sm:$0xf]
  %v38 = vld [vmem:[%s0 + $0x2c] sm:$0xf]
  %v39 = vld [vmem:[%s0 + $0x30] sm:$0xf]
  %v40 = vld [vmem:[%s0 + $0x34] sm:$0xf]
  %v41 = vld [vmem:[%s0 + $0x38] sm:$0xf]
  %v42 = vld [vmem:[%s0 + $0x3c] sm:$0xf]
  %v43 = vld [vmem:[%s0 + $0x40] sm:$0xf]
  %v44 = vld [vmem:[%s0 + $0x44] sm:$0xf]
  %v45 = vld [vmem:[%s0 + $0x48] sm:$0xf]
  %v46 = vld [vmem:[%s0 + $0x4c] sm:$0xf]
  %v47 = vld [vmem:[%s0 + $0x50] sm:$0xf]
  %v48 = vld [vmem:[%s0 + $0x54] sm:$0xf]
  %v49 = vld [vmem:[%s0 + $0x58] sm:$0xf]
  %v50 = vld [vmem:[%s0 + $0x5c] sm:$0xf]
  %v51 = vld [vmem:[%s0 + $0x60] sm:$0xf]
  %v52 = vld [vmem:[%s0 + $0x64] sm:$0xf]
  %v53 = vld [vmem:[%s0 + $0x68] sm:$0xf]
  %v54 = vld [vmem:[%s0 + $0x6c] sm:$0xf]
  %v55 = vld [vmem:[%s0 + $0x70] sm:$0xf]
  %v56 = vld [vmem:[%s0 + $0x74] sm:$0xf]
  %v57 = vld [vmem:[%s0 + $0x78] sm:$0xf]
  %v58 = vld [vmem:[%s0 + $0x7c] sm:$0xf]
  %v59 = vld [vmem:[%s1] sm:$0xf]
  %v60 = vld [vmem:[%s1 + $0x4] sm:$0xf]
  %v61 = vld [vmem:[%s1 + $0x8] sm:$0xf]
  %v62 = vld [vmem:[%s1 + $0xc] sm:$0xf]
  %v63 = vld [vmem:[%s1 + $0x10] sm:$0xf]
  %v64 = vld [vmem:[%s1 + $0x14] sm:$0xf]
  %v65 = vld [vmem:[%s1 + $0x18] sm:$0xf]
  %v66 = vld [vmem:[%s1 + $0x1c] sm:$0xf]
  %v67 = vld [vmem:[%s1 + $0x20] sm:$0xf]
  %v68 = vld [vmem:[%s1 + $0x24] sm:$0xf]
  %v69 = vld [vmem:[%s1 + $0x28] sm:$0xf]
  %v70 = vld [vmem:[%s1 + $0x2c] sm:$0xf]
  %v71 = vld [vmem:[%s1 + $0x30] sm:$0xf]
  %v72 = vld [vmem:[%s1 + $0x34] sm:$0xf]
  %v73 = vld [vmem:[%s1 + $0x38] sm:$0xf]
  %v74 = vld [vmem:[%s1 + $0x3c] sm:$0xf]
  %v75 = vld [vmem:[%s2] sm:$0x1]
  %v77 = vlaneseq
  %v78 = vshrl.u32 %v77, 7
  %v79 = vsub.s32 0, %v78
  %v80 = vrot.slane %v75, %v79
  %v114 = vunpack.c.l.b16 %v27
  %v115 = vunpack.c.l.b16 %v28
  %v116 = vunpack.c.l.b16 %v29
  %v117 = vunpack.c.l.b16 %v30
  %v118 = vunpack.c.l.b16 %v31
  %v119 = vunpack.c.l.b16 %v32
  %v120 = vunpack.c.l.b16 %v33
  %v121 = vunpack.c.l.b16 %v34
  %v122 = vunpack.c.l.b16 %v35
  %v123 = vunpack.c.l.b16 %v36
  %v124 = vunpack.c.l.b16 %v37
  %v125 = vunpack.c.l.b16 %v38
  %v126 = vunpack.c.l.b16 %v39
  %v127 = vunpack.c.l.b16 %v40
  %v128 = vunpack.c.l.b16 %v41
  %v129 = vunpack.c.l.b16 %v42
  %v130 = vunpack.c.l.b16 %v43
  %v131 = vunpack.c.l.b16 %v44
  %v132 = vunpack.c.l.b16 %v45
  %v133 = vunpack.c.l.b16 %v46
  %v134 = vunpack.c.l.b16 %v47
  %v135 = vunpack.c.l.b16 %v48
  %v136 = vunpack.c.l.b16 %v49
  %v137 = vunpack.c.l.b16 %v50
  %v138 = vunpack.c.l.b16 %v51
  %v139 = vunpack.c.l.b16 %v52
  %v140 = vunpack.c.l.b16 %v53
  %v141 = vunpack.c.l.b16 %v54
  %v142 = vunpack.c.l.b16 %v55
  %v143 = vunpack.c.l.b16 %v56
  %v144 = vunpack.c.l.b16 %v57
  %v145 = vunpack.c.l.b16 %v58
  %v146 = vpack.c.b16 %v115, %v114
  %v147 = vpack.c.b16 %v117, %v116
  %v148 = vpack.c.b16 %v119, %v118
  %v149 = vpack.c.b16 %v121, %v120
  %v150 = vpack.c.b16 %v123, %v122
  %v151 = vpack.c.b16 %v125, %v124
  %v152 = vpack.c.b16 %v127, %v126
  %v153 = vpack.c.b16 %v129, %v128
  %v154 = vpack.c.b16 %v131, %v130
  %v155 = vpack.c.b16 %v133, %v132
  %v156 = vpack.c.b16 %v135, %v134
  %v157 = vpack.c.b16 %v137, %v136
  %v158 = vpack.c.b16 %v139, %v138
  %v159 = vpack.c.b16 %v141, %v140
  %v160 = vpack.c.b16 %v143, %v142
  %v161 = vpack.c.b16 %v145, %v144
  %v194 = vunpack.c.l.b16 %v59
  %v195 = vunpack.c.l.b16 %v60
  %v196 = vunpack.c.l.b16 %v61
  %v197 = vunpack.c.l.b16 %v62
  %v198 = vunpack.c.l.b16 %v63
  %v199 = vunpack.c.l.b16 %v64
  %v200 = vunpack.c.l.b16 %v65
  %v201 = vunpack.c.l.b16 %v66
  %v202 = vunpack.c.l.b16 %v67
  %v203 = vunpack.c.l.b16 %v68
  %v204 = vunpack.c.l.b16 %v69
  %v205 = vunpack.c.l.b16 %v70
  %v206 = vunpack.c.l.b16 %v71
  %v207 = vunpack.c.l.b16 %v72
  %v208 = vunpack.c.l.b16 %v73
  %v209 = vunpack.c.l.b16 %v74
  %v210 = vpack.c.b16 %v195, %v194
  %v211 = vpack.c.b16 %v197, %v196
  %v212 = vpack.c.b16 %v199, %v198
  %v213 = vpack.c.b16 %v201, %v200
  %v214 = vpack.c.b16 %v203, %v202
  %v215 = vpack.c.b16 %v205, %v204
  %v216 = vpack.c.b16 %v207, %v206
  %v217 = vpack.c.b16 %v209, %v208
  %226 = vmatprep.subr.bf16.mxu0 0
  %227 = vmatpush1.bf16.msra.mxu0 %v217
  %228 = vmatprep.subr.bf16.mxu0 0
  %229 = vmatpush1.bf16.msra.mxu0 %v216
  %230 = vmatprep.subr.bf16.mxu0 0
  %231 = vmatpush1.bf16.msra.mxu0 %v215
  %232 = vmatprep.subr.bf16.mxu0 0
  %233 = vmatpush1.bf16.msra.mxu0 %v214
  %234 = vmatprep.subr.bf16.mxu0 0
  %235 = vmatpush1.bf16.msra.mxu0 %v213
  %236 = vmatprep.subr.bf16.mxu0 0
  %237 = vmatpush1.bf16.msra.mxu0 %v212
  %238 = vmatprep.subr.bf16.mxu0 0
  %239 = vmatpush1.bf16.msra.mxu0 %v211
  %240 = vmatprep.subr.bf16.mxu0 0
  %241 = vmatpush1.bf16.msra.mxu0 %v210
  %242 = vmatprep.subr.bf16.mxu0 0
  %243 = vmatpush2.bf16.msra.mxu0 0
  %244 = vmatprep.subr.bf16.mxu0 0
  %245 = vmatpush2.bf16.msra.mxu0 0
  %246 = vmatprep.subr.bf16.mxu0 0
  %247 = vmatpush2.bf16.msra.mxu0 0
  %248 = vmatprep.subr.bf16.mxu0 0
  %249 = vmatpush2.bf16.msra.mxu0 0
  %250 = vmatprep.subr.bf16.mxu0 0
  %251 = vmatpush2.bf16.msra.mxu0 0
  %252 = vmatprep.subr.bf16.mxu0 0
  %253 = vmatpush2.bf16.msra.mxu0 0
  %254 = vmatprep.subr.bf16.mxu0 0
  %255 = vmatpush2.bf16.msra.mxu0 0
  %256 = vmatprep.subr.bf16.mxu0 0
  %257 = vmatpush2.bf16.msra.mxu0 0
  %258 = vmatprep.mubr.bf16.mxu0 0
  %259 = vmatmul.mubr.bf16.gmra.mxu0 %v146
  %v260 = vpop.f32.mrf.mxu0
  %v261 = vadd.f32 %v80, %v260
  %v262 = vpop.f32.mrf.mxu0
  %v263 = vpop.f32.mrf.mxu0
  %v264 = vadd.f32 %v80, %v263
  %v265 = vpop.f32.mrf.mxu0
  %266 = vmatprep.mubr.bf16.mxu0 0
  %267 = vmatmul.mubr.bf16.gmra.mxu0 %v147
  %v268 = vpop.f32.mrf.mxu0
  %v269 = vadd.f32 %v80, %v268
  %v270 = vpop.f32.mrf.mxu0
  %v271 = vpop.f32.mrf.mxu0
  %v272 = vadd.f32 %v80, %v271
  %v273 = vpop.f32.mrf.mxu0
  %274 = vmatprep.mubr.bf16.mxu0 0
  %275 = vmatmul.mubr.bf16.gmra.mxu0 %v148
  %v276 = vpop.f32.mrf.mxu0
  %v277 = vadd.f32 %v80, %v276
  %v278 = vpop.f32.mrf.mxu0
  %v279 = vpop.f32.mrf.mxu0
  %v280 = vadd.f32 %v80, %v279
  %v281 = vpop.f32.mrf.mxu0
  %282 = vmatprep.mubr.bf16.mxu0 0
  %283 = vmatmul.mubr.bf16.gmra.mxu0 %v149
  %v284 = vpop.f32.mrf.mxu0
  %v285 = vadd.f32 %v80, %v284
  %v286 = vpop.f32.mrf.mxu0
  %v287 = vpop.f32.mrf.mxu0
  %v288 = vadd.f32 %v80, %v287
  %v289 = vpop.f32.mrf.mxu0
  %290 = vmatprep.mubr.bf16.mxu0 0
  %291 = vmatmul.mubr.bf16.gmra.mxu0 %v150
  %v292 = vpop.f32.mrf.mxu0
  %v293 = vadd.f32 %v80, %v292
  %v294 = vpop.f32.mrf.mxu0
  %v295 = vpop.f32.mrf.mxu0
  %v296 = vadd.f32 %v80, %v295
  %v297 = vpop.f32.mrf.mxu0
  %298 = vmatprep.mubr.bf16.mxu0 0
  %299 = vmatmul.mubr.bf16.gmra.mxu0 %v151
  %v300 = vpop.f32.mrf.mxu0
  %v301 = vadd.f32 %v80, %v300
  %v302 = vpop.f32.mrf.mxu0
  %v303 = vpop.f32.mrf.mxu0
  %v304 = vadd.f32 %v80, %v303
  %v305 = vpop.f32.mrf.mxu0
  %306 = vmatprep.mubr.bf16.mxu0 0
  %307 = vmatmul.mubr.bf16.gmra.mxu0 %v152
  %v308 = vpop.f32.mrf.mxu0
  %v309 = vadd.f32 %v80, %v308
  %v310 = vpop.f32.mrf.mxu0
  %v311 = vpop.f32.mrf.mxu0
  %v312 = vadd.f32 %v80, %v311
  %v313 = vpop.f32.mrf.mxu0
  %314 = vmatprep.mubr.bf16.mxu0 0
  %315 = vmatmul.mubr.bf16.gmra.mxu0 %v153
  %v316 = vpop.f32.mrf.mxu0
  %v317 = vadd.f32 %v80, %v316
  %v318 = vpop.f32.mrf.mxu0
  %v319 = vpop.f32.mrf.mxu0
  %v320 = vadd.f32 %v80, %v319
  %v321 = vpop.f32.mrf.mxu0
  %322 = vmatprep.mubr.bf16.mxu0 0
  %323 = vmatmul.mubr.bf16.gmra.mxu0 %v154
  %v324 = vpop.f32.mrf.mxu0
  %v325 = vadd.f32 %v80, %v324
  %v326 = vpop.f32.mrf.mxu0
  %v327 = vpop.f32.mrf.mxu0
  %v328 = vadd.f32 %v80, %v327
  %v329 = vpop.f32.mrf.mxu0
  %330 = vmatprep.mubr.bf16.mxu0 0
  %331 = vmatmul.mubr.bf16.gmra.mxu0 %v155
  %v332 = vpop.f32.mrf.mxu0
  %v333 = vadd.f32 %v80, %v332
  %v334 = vpop.f32.mrf.mxu0
  %v335 = vpop.f32.mrf.mxu0
  %v336 = vadd.f32 %v80, %v335
  %v337 = vpop.f32.mrf.mxu0
  %338 = vmatprep.mubr.bf16.mxu0 0
  %339 = vmatmul.mubr.bf16.gmra.mxu0 %v156
  %v340 = vpop.f32.mrf.mxu0
  %v341 = vadd.f32 %v80, %v340
  %v342 = vpop.f32.mrf.mxu0
  %v343 = vpop.f32.mrf.mxu0
  %v344 = vadd.f32 %v80, %v343
  %v345 = vpop.f32.mrf.mxu0
  %346 = vmatprep.mubr.bf16.mxu0 0
  %347 = vmatmul.mubr.bf16.gmra.mxu0 %v157
  %v348 = vpop.f32.mrf.mxu0
  %v349 = vadd.f32 %v80, %v348
  %v350 = vpop.f32.mrf.mxu0
  %v351 = vpop.f32.mrf.mxu0
  %v352 = vadd.f32 %v80, %v351
  %v353 = vpop.f32.mrf.mxu0
  %354 = vmatprep.mubr.bf16.mxu0 0
  %355 = vmatmul.mubr.bf16.gmra.mxu0 %v158
  %v356 = vpop.f32.mrf.mxu0
  %v357 = vadd.f32 %v80, %v356
  %v358 = vpop.f32.mrf.mxu0
  %v359 = vpop.f32.mrf.mxu0
  %v360 = vadd.f32 %v80, %v359
  %v361 = vpop.f32.mrf.mxu0
  %362 = vmatprep.mubr.bf16.mxu0 0
  %363 = vmatmul.mubr.bf16.gmra.mxu0 %v159
  %v364 = vpop.f32.mrf.mxu0
  %v365 = vadd.f32 %v80, %v364
  %v366 = vpop.f32.mrf.mxu0
  %v367 = vpop.f32.mrf.mxu0
  %v368 = vadd.f32 %v80, %v367
  %v369 = vpop.f32.mrf.mxu0
  %370 = vmatprep.mubr.bf16.mxu0 0
  %371 = vmatmul.mubr.bf16.gmra.mxu0 %v160
  %v372 = vpop.f32.mrf.mxu0
  %v373 = vadd.f32 %v80, %v372
  %v374 = vpop.f32.mrf.mxu0
  %v375 = vpop.f32.mrf.mxu0
  %v376 = vadd.f32 %v80, %v375
  %v377 = vpop.f32.mrf.mxu0
  %378 = vmatprep.mubr.bf16.mxu0 0
  %379 = vmatmul.mubr.bf16.gmra.mxu0 %v161
  %v380 = vpop.f32.mrf.mxu0
  %v381 = vadd.f32 %v80, %v380
  %v382 = vpop.f32.mrf.mxu0
  %v383 = vpop.f32.mrf.mxu0
  %v384 = vadd.f32 %v80, %v383
  %v385 = vpop.f32.mrf.mxu0
  %386 = vdwg.mxu0
  %v387 = vmax.f32 %v261, 0.0
  %v388 = vmax.f32 %v264, 0.0
  %v389 = vmax.f32 %v269, 0.0
  %v390 = vmax.f32 %v272, 0.0
  %v391 = vmax.f32 %v277, 0.0
  %v392 = vmax.f32 %v280, 0.0
  %v393 = vmax.f32 %v285, 0.0
  %v394 = vmax.f32 %v288, 0.0
  %v395 = vmax.f32 %v293, 0.0
  %v396 = vmax.f32 %v296, 0.0
  %v397 = vmax.f32 %v301, 0.0
  %v398 = vmax.f32 %v304, 0.0
  %v399 = vmax.f32 %v309, 0.0
  %v400 = vmax.f32 %v312, 0.0
  %v401 = vmax.f32 %v317, 0.0
  %v402 = vmax.f32 %v320, 0.0
  %v403 = vmax.f32 %v325, 0.0
  %v404 = vmax.f32 %v328, 0.0
  %v405 = vmax.f32 %v333, 0.0
  %v406 = vmax.f32 %v336, 0.0
  %v407 = vmax.f32 %v341, 0.0
  %v408 = vmax.f32 %v344, 0.0
  %v409 = vmax.f32 %v349, 0.0
  %v410 = vmax.f32 %v352, 0.0
  %v411 = vmax.f32 %v357, 0.0
  %v412 = vmax.f32 %v360, 0.0
  %v413 = vmax.f32 %v365, 0.0
  %v414 = vmax.f32 %v368, 0.0
  %v415 = vmax.f32 %v373, 0.0
  %v416 = vmax.f32 %v376, 0.0
  %v417 = vmax.f32 %v381, 0.0
  %v418 = vmax.f32 %v384, 0.0
  %v419 = vpack.c.bf16 %v388, %v387
  %v420 = vpack.c.bf16 %v390, %v389
  %v421 = vpack.c.bf16 %v392, %v391
  %v422 = vpack.c.bf16 %v394, %v393
  %v423 = vpack.c.bf16 %v396, %v395
  %v424 = vpack.c.bf16 %v398, %v397
  %v425 = vpack.c.bf16 %v400, %v399
  %v426 = vpack.c.bf16 %v402, %v401
  %v427 = vpack.c.bf16 %v404, %v403
  %v428 = vpack.c.bf16 %v406, %v405
  %v429 = vpack.c.bf16 %v408, %v407
  %v430 = vpack.c.bf16 %v410, %v409
  %v431 = vpack.c.bf16 %v412, %v411
  %v432 = vpack.c.bf16 %v414, %v413
  %v433 = vpack.c.bf16 %v416, %v415
  %v434 = vpack.c.bf16 %v418, %v417
  %v435 = vld [vmem:[%s3] sm:$0xf]
  %v436 = vld [vmem:[%s3 + $0x4] sm:$0xf]
  %v437 = vld [vmem:[%s3 + $0x8] sm:$0xf]
  %v438 = vld [vmem:[%s3 + $0xc] sm:$0xf]
  %v439 = vld [vmem:[%s3 + $0x10] sm:$0xf]
  %v440 = vld [vmem:[%s3 + $0x14] sm:$0xf]
  %v441 = vld [vmem:[%s3 + $0x18] sm:$0xf]
  %v442 = vld [vmem:[%s3 + $0x1c] sm:$0xf]
  %v443 = vld [vmem:[%s3 + $0x20] sm:$0xf]
  %v444 = vld [vmem:[%s3 + $0x24] sm:$0xf]
  %v445 = vld [vmem:[%s3 + $0x28] sm:$0xf]
  %v446 = vld [vmem:[%s3 + $0x2c] sm:$0xf]
  %v447 = vld [vmem:[%s3 + $0x30] sm:$0xf]
  %v448 = vld [vmem:[%s3 + $0x34] sm:$0xf]
  %v449 = vld [vmem:[%s3 + $0x38] sm:$0xf]
  %v450 = vld [vmem:[%s3 + $0x3c] sm:$0xf]
  %v451 = vld [vmem:[%s4] sm:$0x1]
  %v453 = vlaneseq
  %v454 = vshrl.u32 %v453, 7
  %v455 = vsub.s32 0, %v454
  %v456 = vrot.slane %v451, %v455
  %v474 = vunpack.c.l.b16 %v435
  %v475 = vunpack.c.l.b16 %v436
  %v476 = vunpack.c.l.b16 %v437
  %v477 = vunpack.c.l.b16 %v438
  %v478 = vunpack.c.l.b16 %v439
  %v479 = vunpack.c.l.b16 %v440
  %v480 = vunpack.c.l.b16 %v441
  %v481 = vunpack.c.l.b16 %v442
  %v482 = vunpack.c.l.b16 %v443
  %v483 = vunpack.c.l.b16 %v444
  %v484 = vunpack.c.l.b16 %v445
  %v485 = vunpack.c.l.b16 %v446
  %v486 = vunpack.c.l.b16 %v447
  %v487 = vunpack.c.l.b16 %v448
  %v488 = vunpack.c.l.b16 %v449
  %v489 = vunpack.c.l.b16 %v450
  %v490 = vpack.c.b16 %v475, %v474
  %v491 = vpack.c.b16 %v477, %v476
  %v492 = vpack.c.b16 %v479, %v478
  %v493 = vpack.c.b16 %v481, %v480
  %v494 = vpack.c.b16 %v483, %v482
  %v495 = vpack.c.b16 %v485, %v484
  %v496 = vpack.c.b16 %v487, %v486
  %v497 = vpack.c.b16 %v489, %v488
  %506 = vmatprep.subr.bf16.mxu0 0
  %507 = vmatpush1.bf16.msra.mxu0 %v497
  %508 = vmatprep.subr.bf16.mxu0 0
  %509 = vmatpush1.bf16.msra.mxu0 %v496
  %510 = vmatprep.subr.bf16.mxu0 0
  %511 = vmatpush1.bf16.msra.mxu0 %v495
  %512 = vmatprep.subr.bf16.mxu0 0
  %513 = vmatpush1.bf16.msra.mxu0 %v494
  %514 = vmatprep.subr.bf16.mxu0 0
  %515 = vmatpush1.bf16.msra.mxu0 %v493
  %516 = vmatprep.subr.bf16.mxu0 0
  %517 = vmatpush1.bf16.msra.mxu0 %v492
  %518 = vmatprep.subr.bf16.mxu0 0
  %519 = vmatpush1.bf16.msra.mxu0 %v491
  %520 = vmatprep.subr.bf16.mxu0 0
  %521 = vmatpush1.bf16.msra.mxu0 %v490
  %522 = vmatprep.subr.bf16.mxu0 0
  %523 = vmatpush2.bf16.msra.mxu0 0
  %524 = vmatprep.subr.bf16.mxu0 0
  %525 = vmatpush2.bf16.msra.mxu0 0
  %526 = vmatprep.subr.bf16.mxu0 0
  %527 = vmatpush2.bf16.msra.mxu0 0
  %528 = vmatprep.subr.bf16.mxu0 0
  %529 = vmatpush2.bf16.msra.mxu0 0
  %530 = vmatprep.subr.bf16.mxu0 0
  %531 = vmatpush2.bf16.msra.mxu0 0
  %532 = vmatprep.subr.bf16.mxu0 0
  %533 = vmatpush2.bf16.msra.mxu0 0
  %534 = vmatprep.subr.bf16.mxu0 0
  %535 = vmatpush2.bf16.msra.mxu0 0
  %536 = vmatprep.subr.bf16.mxu0 0
  %537 = vmatpush2.bf16.msra.mxu0 0
  %538 = vmatprep.mubr.bf16.mxu0 0
  %539 = vmatmul.mubr.bf16.gmra.mxu0 %v419
  %v540 = vpop.f32.mrf.mxu0
  %v541 = vadd.f32 %v456, %v540
  %v542 = vpop.f32.mrf.mxu0
  %v543 = vpop.f32.mrf.mxu0
  %v544 = vadd.f32 %v456, %v543
  %v545 = vpop.f32.mrf.mxu0
  %546 = vmatprep.mubr.bf16.mxu0 0
  %547 = vmatmul.mubr.bf16.gmra.mxu0 %v420
  %v548 = vpop.f32.mrf.mxu0
  %v549 = vadd.f32 %v456, %v548
  %v550 = vpop.f32.mrf.mxu0
  %v551 = vpop.f32.mrf.mxu0
  %v552 = vadd.f32 %v456, %v551
  %v553 = vpop.f32.mrf.mxu0
  %554 = vmatprep.mubr.bf16.mxu0 0
  %555 = vmatmul.mubr.bf16.gmra.mxu0 %v421
  %v556 = vpop.f32.mrf.mxu0
  %v557 = vadd.f32 %v456, %v556
  %v558 = vpop.f32.mrf.mxu0
  %v559 = vpop.f32.mrf.mxu0
  %v560 = vadd.f32 %v456, %v559
  %v561 = vpop.f32.mrf.mxu0
  %562 = vmatprep.mubr.bf16.mxu0 0
  %563 = vmatmul.mubr.bf16.gmra.mxu0 %v422
  %v564 = vpop.f32.mrf.mxu0
  %v565 = vadd.f32 %v456, %v564
  %v566 = vpop.f32.mrf.mxu0
  %v567 = vpop.f32.mrf.mxu0
  %v568 = vadd.f32 %v456, %v567
  %v569 = vpop.f32.mrf.mxu0
  %570 = vmatprep.mubr.bf16.mxu0 0
  %571 = vmatmul.mubr.bf16.gmra.mxu0 %v423
  %v572 = vpop.f32.mrf.mxu0
  %v573 = vadd.f32 %v456, %v572
  %v574 = vpop.f32.mrf.mxu0
  %v575 = vpop.f32.mrf.mxu0
  %v576 = vadd.f32 %v456, %v575
  %v577 = vpop.f32.mrf.mxu0
  %578 = vmatprep.mubr.bf16.mxu0 0
  %579 = vmatmul.mubr.bf16.gmra.mxu0 %v424
  %v580 = vpop.f32.mrf.mxu0
  %v581 = vadd.f32 %v456, %v580
  %v582 = vpop.f32.mrf.mxu0
  %v583 = vpop.f32.mrf.mxu0
  %v584 = vadd.f32 %v456, %v583
  %v585 = vpop.f32.mrf.mxu0
  %586 = vmatprep.mubr.bf16.mxu0 0
  %587 = vmatmul.mubr.bf16.gmra.mxu0 %v425
  %v588 = vpop.f32.mrf.mxu0
  %v589 = vadd.f32 %v456, %v588
  %v590 = vpop.f32.mrf.mxu0
  %v591 = vpop.f32.mrf.mxu0
  %v592 = vadd.f32 %v456, %v591
  %v593 = vpop.f32.mrf.mxu0
  %594 = vmatprep.mubr.bf16.mxu0 0
  %595 = vmatmul.mubr.bf16.gmra.mxu0 %v426
  %v596 = vpop.f32.mrf.mxu0
  %v597 = vadd.f32 %v456, %v596
  %v598 = vpop.f32.mrf.mxu0
  %v599 = vpop.f32.mrf.mxu0
  %v600 = vadd.f32 %v456, %v599
  %v601 = vpop.f32.mrf.mxu0
  %602 = vmatprep.mubr.bf16.mxu0 0
  %603 = vmatmul.mubr.bf16.gmra.mxu0 %v427
  %v604 = vpop.f32.mrf.mxu0
  %v605 = vadd.f32 %v456, %v604
  %v606 = vpop.f32.mrf.mxu0
  %v607 = vpop.f32.mrf.mxu0
  %v608 = vadd.f32 %v456, %v607
  %v609 = vpop.f32.mrf.mxu0
  %610 = vmatprep.mubr.bf16.mxu0 0
  %611 = vmatmul.mubr.bf16.gmra.mxu0 %v428
  %v612 = vpop.f32.mrf.mxu0
  %v613 = vadd.f32 %v456, %v612
  %v614 = vpop.f32.mrf.mxu0
  %v615 = vpop.f32.mrf.mxu0
  %v616 = vadd.f32 %v456, %v615
  %v617 = vpop.f32.mrf.mxu0
  %618 = vmatprep.mubr.bf16.mxu0 0
  %619 = vmatmul.mubr.bf16.gmra.mxu0 %v429
  %v620 = vpop.f32.mrf.mxu0
  %v621 = vadd.f32 %v456, %v620
  %v622 = vpop.f32.mrf.mxu0
  %v623 = vpop.f32.mrf.mxu0
  %v624 = vadd.f32 %v456, %v623
  %v625 = vpop.f32.mrf.mxu0
  %626 = vmatprep.mubr.bf16.mxu0 0
  %627 = vmatmul.mubr.bf16.gmra.mxu0 %v430
  %v628 = vpop.f32.mrf.mxu0
  %v629 = vadd.f32 %v456, %v628
  %v630 = vpop.f32.mrf.mxu0
  %v631 = vpop.f32.mrf.mxu0
  %v632 = vadd.f32 %v456, %v631
  %v633 = vpop.f32.mrf.mxu0
  %634 = vmatprep.mubr.bf16.mxu0 0
  %635 = vmatmul.mubr.bf16.gmra.mxu0 %v431
  %v636 = vpop.f32.mrf.mxu0
  %v637 = vadd.f32 %v456, %v636
  %v638 = vpop.f32.mrf.mxu0
  %v639 = vpop.f32.mrf.mxu0
  %v640 = vadd.f32 %v456, %v639
  %v641 = vpop.f32.mrf.mxu0
  %642 = vmatprep.mubr.bf16.mxu0 0
  %643 = vmatmul.mubr.bf16.gmra.mxu0 %v432
  %v644 = vpop.f32.mrf.mxu0
  %v645 = vadd.f32 %v456, %v644
  %v646 = vpop.f32.mrf.mxu0
  %v647 = vpop.f32.mrf.mxu0
  %v648 = vadd.f32 %v456, %v647
  %v649 = vpop.f32.mrf.mxu0
  %650 = vmatprep.mubr.bf16.mxu0 0
  %651 = vmatmul.mubr.bf16.gmra.mxu0 %v433
  %v652 = vpop.f32.mrf.mxu0
  %v653 = vadd.f32 %v456, %v652
  %v654 = vpop.f32.mrf.mxu0
  %v655 = vpop.f32.mrf.mxu0
  %v656 = vadd.f32 %v456, %v655
  %v657 = vpop.f32.mrf.mxu0
  %658 = vmatprep.mubr.bf16.mxu0 0
  %659 = vmatmul.mubr.bf16.gmra.mxu0 %v434
  %v660 = vpop.f32.mrf.mxu0
  %v661 = vadd.f32 %v456, %v660
  %v662 = vpop.f32.mrf.mxu0
  %v663 = vpop.f32.mrf.mxu0
  %v664 = vadd.f32 %v456, %v663
  %v665 = vpop.f32.mrf.mxu0
  %666 = vdwg.mxu0
  %v667 = vmax.f32 %v541, 0.0
  %v668 = vmax.f32 %v544, 0.0
  %v669 = vmax.f32 %v549, 0.0
  %v670 = vmax.f32 %v552, 0.0
  %v671 = vmax.f32 %v557, 0.0
  %v672 = vmax.f32 %v560, 0.0
  %v673 = vmax.f32 %v565, 0.0
  %v674 = vmax.f32 %v568, 0.0
  %v675 = vmax.f32 %v573, 0.0
  %v676 = vmax.f32 %v576, 0.0
  %v677 = vmax.f32 %v581, 0.0
  %v678 = vmax.f32 %v584, 0.0
  %v679 = vmax.f32 %v589, 0.0
  %v680 = vmax.f32 %v592, 0.0
  %v681 = vmax.f32 %v597, 0.0
  %v682 = vmax.f32 %v600, 0.0
  %v683 = vmax.f32 %v605, 0.0
  %v684 = vmax.f32 %v608, 0.0
  %v685 = vmax.f32 %v613, 0.0
  %v686 = vmax.f32 %v616, 0.0
  %v687 = vmax.f32 %v621, 0.0
  %v688 = vmax.f32 %v624, 0.0
  %v689 = vmax.f32 %v629, 0.0
  %v690 = vmax.f32 %v632, 0.0
  %v691 = vmax.f32 %v637, 0.0
  %v692 = vmax.f32 %v640, 0.0
  %v693 = vmax.f32 %v645, 0.0
  %v694 = vmax.f32 %v648, 0.0
  %v695 = vmax.f32 %v653, 0.0
  %v696 = vmax.f32 %v656, 0.0
  %v697 = vmax.f32 %v661, 0.0
  %v698 = vmax.f32 %v664, 0.0
  %v699 = vpack.c.bf16 %v668, %v667
  %v700 = vpack.c.bf16 %v670, %v669
  %v701 = vpack.c.bf16 %v672, %v671
  %v702 = vpack.c.bf16 %v674, %v673
  %v703 = vpack.c.bf16 %v676, %v675
  %v704 = vpack.c.bf16 %v678, %v677
  %v705 = vpack.c.bf16 %v680, %v679
  %v706 = vpack.c.bf16 %v682, %v681
  %v707 = vpack.c.bf16 %v684, %v683
  %v708 = vpack.c.bf16 %v686, %v685
  %v709 = vpack.c.bf16 %v688, %v687
  %v710 = vpack.c.bf16 %v690, %v689
  %v711 = vpack.c.bf16 %v692, %v691
  %v712 = vpack.c.bf16 %v694, %v693
  %v713 = vpack.c.bf16 %v696, %v695
  %v714 = vpack.c.bf16 %v698, %v697
  %v715 = vld [vmem:[%s5] sm:$0xf]
  %v716 = vld [vmem:[%s5 + $0x4] sm:$0xf]
  %v717 = vld [vmem:[%s5 + $0x8] sm:$0xf]
  %v718 = vld [vmem:[%s5 + $0xc] sm:$0xf]
  %v719 = vld [vmem:[%s5 + $0x10] sm:$0xf]
  %v720 = vld [vmem:[%s5 + $0x14] sm:$0xf]
  %v721 = vld [vmem:[%s5 + $0x18] sm:$0xf]
  %v722 = vld [vmem:[%s5 + $0x1c] sm:$0xf]
  %v723 = vld [vmem:[%s5 + $0x20] sm:$0xf]
  %v724 = vld [vmem:[%s5 + $0x24] sm:$0xf]
  %v725 = vld [vmem:[%s5 + $0x28] sm:$0xf]
  %v726 = vld [vmem:[%s5 + $0x2c] sm:$0xf]
  %v727 = vld [vmem:[%s5 + $0x30] sm:$0xf]
  %v728 = vld [vmem:[%s5 + $0x34] sm:$0xf]
  %v729 = vld [vmem:[%s5 + $0x38] sm:$0xf]
  %v730 = vld [vmem:[%s5 + $0x3c] sm:$0xf]
  %v731 = vld [vmem:[%s6] sm:$0x1]
  %v733 = vlaneseq
  %v734 = vshrl.u32 %v733, 7
  %v735 = vsub.s32 0, %v734
  %v736 = vrot.slane %v731, %v735
  %v754 = vunpack.c.l.b16 %v715
  %v755 = vunpack.c.l.b16 %v716
  %v756 = vunpack.c.l.b16 %v717
  %v757 = vunpack.c.l.b16 %v718
  %v758 = vunpack.c.l.b16 %v719
  %v759 = vunpack.c.l.b16 %v720
  %v760 = vunpack.c.l.b16 %v721
  %v761 = vunpack.c.l.b16 %v722
  %v762 = vunpack.c.l.b16 %v723
  %v763 = vunpack.c.l.b16 %v724
  %v764 = vunpack.c.l.b16 %v725
  %v765 = vunpack.c.l.b16 %v726
  %v766 = vunpack.c.l.b16 %v727
  %v767 = vunpack.c.l.b16 %v728
  %v768 = vunpack.c.l.b16 %v729
  %v769 = vunpack.c.l.b16 %v730
  %v770 = vpack.c.b16 %v755, %v754
  %v771 = vpack.c.b16 %v757, %v756
  %v772 = vpack.c.b16 %v759, %v758
  %v773 = vpack.c.b16 %v761, %v760
  %v774 = vpack.c.b16 %v763, %v762
  %v775 = vpack.c.b16 %v765, %v764
  %v776 = vpack.c.b16 %v767, %v766
  %v777 = vpack.c.b16 %v769, %v768
  %786 = vmatprep.subr.bf16.mxu0 0
  %787 = vmatpush1.bf16.msra.mxu0 %v777
  %788 = vmatprep.subr.bf16.mxu0 0
  %789 = vmatpush1.bf16.msra.mxu0 %v776
  %790 = vmatprep.subr.bf16.mxu0 0
  %791 = vmatpush1.bf16.msra.mxu0 %v775
  %792 = vmatprep.subr.bf16.mxu0 0
  %793 = vmatpush1.bf16.msra.mxu0 %v774
  %794 = vmatprep.subr.bf16.mxu0 0
  %795 = vmatpush1.bf16.msra.mxu0 %v773
  %796 = vmatprep.subr.bf16.mxu0 0
  %797 = vmatpush1.bf16.msra.mxu0 %v772
  %798 = vmatprep.subr.bf16.mxu0 0
  %799 = vmatpush1.bf16.msra.mxu0 %v771
  %800 = vmatprep.subr.bf16.mxu0 0
  %801 = vmatpush1.bf16.msra.mxu0 %v770
  %802 = vmatprep.subr.bf16.mxu0 0
  %803 = vmatpush2.bf16.msra.mxu0 0
  %804 = vmatprep.subr.bf16.mxu0 0
  %805 = vmatpush2.bf16.msra.mxu0 0
  %806 = vmatprep.subr.bf16.mxu0 0
  %807 = vmatpush2.bf16.msra.mxu0 0
  %808 = vmatprep.subr.bf16.mxu0 0
  %809 = vmatpush2.bf16.msra.mxu0 0
  %810 = vmatprep.subr.bf16.mxu0 0
  %811 = vmatpush2.bf16.msra.mxu0 0
  %812 = vmatprep.subr.bf16.mxu0 0
  %813 = vmatpush2.bf16.msra.mxu0 0
  %814 = vmatprep.subr.bf16.mxu0 0
  %815 = vmatpush2.bf16.msra.mxu0 0
  %816 = vmatprep.subr.bf16.mxu0 0
  %817 = vmatpush2.bf16.msra.mxu0 0
  %818 = vmatprep.mubr.bf16.mxu0 0
  %819 = vmatmul.mubr.bf16.gmra.mxu0 %v699
  %v820 = vpop.f32.mrf.mxu0
  %v821 = vadd.f32 %v736, %v820
  %v822 = vpop.f32.mrf.mxu0
  %v823 = vpop.f32.mrf.mxu0
  %v824 = vadd.f32 %v736, %v823
  %v825 = vpop.f32.mrf.mxu0
  %826 = vmatprep.mubr.bf16.mxu0 0
  %827 = vmatmul.mubr.bf16.gmra.mxu0 %v700
  %v828 = vpop.f32.mrf.mxu0
  %v829 = vadd.f32 %v736, %v828
  %v830 = vpop.f32.mrf.mxu0
  %v831 = vpop.f32.mrf.mxu0
  %v832 = vadd.f32 %v736, %v831
  %v833 = vpop.f32.mrf.mxu0
  %834 = vmatprep.mubr.bf16.mxu0 0
  %835 = vmatmul.mubr.bf16.gmra.mxu0 %v701
  %v836 = vpop.f32.mrf.mxu0
  %v837 = vadd.f32 %v736, %v836
  %v838 = vpop.f32.mrf.mxu0
  %v839 = vpop.f32.mrf.mxu0
  %v840 = vadd.f32 %v736, %v839
  %v841 = vpop.f32.mrf.mxu0
  %842 = vmatprep.mubr.bf16.mxu0 0
  %843 = vmatmul.mubr.bf16.gmra.mxu0 %v702
  %v844 = vpop.f32.mrf.mxu0
  %v845 = vadd.f32 %v736, %v844
  %v846 = vpop.f32.mrf.mxu0
  %v847 = vpop.f32.mrf.mxu0
  %v848 = vadd.f32 %v736, %v847
  %v849 = vpop.f32.mrf.mxu0
  %850 = vmatprep.mubr.bf16.mxu0 0
  %851 = vmatmul.mubr.bf16.gmra.mxu0 %v703
  %v852 = vpop.f32.mrf.mxu0
  %v853 = vadd.f32 %v736, %v852
  %v854 = vpop.f32.mrf.mxu0
  %v855 = vpop.f32.mrf.mxu0
  %v856 = vadd.f32 %v736, %v855
  %v857 = vpop.f32.mrf.mxu0
  %858 = vmatprep.mubr.bf16.mxu0 0
  %859 = vmatmul.mubr.bf16.gmra.mxu0 %v704
  %v860 = vpop.f32.mrf.mxu0
  %v861 = vadd.f32 %v736, %v860
  %v862 = vpop.f32.mrf.mxu0
  %v863 = vpop.f32.mrf.mxu0
  %v864 = vadd.f32 %v736, %v863
  %v865 = vpop.f32.mrf.mxu0
  %866 = vmatprep.mubr.bf16.mxu0 0
  %867 = vmatmul.mubr.bf16.gmra.mxu0 %v705
  %v868 = vpop.f32.mrf.mxu0
  %v869 = vadd.f32 %v736, %v868
  %v870 = vpop.f32.mrf.mxu0
  %v871 = vpop.f32.mrf.mxu0
  %v872 = vadd.f32 %v736, %v871
  %v873 = vpop.f32.mrf.mxu0
  %874 = vmatprep.mubr.bf16.mxu0 0
  %875 = vmatmul.mubr.bf16.gmra.mxu0 %v706
  %v876 = vpop.f32.mrf.mxu0
  %v877 = vadd.f32 %v736, %v876
  %v878 = vpop.f32.mrf.mxu0
  %v879 = vpop.f32.mrf.mxu0
  %v880 = vadd.f32 %v736, %v879
  %v881 = vpop.f32.mrf.mxu0
  %882 = vmatprep.mubr.bf16.mxu0 0
  %883 = vmatmul.mubr.bf16.gmra.mxu0 %v707
  %v884 = vpop.f32.mrf.mxu0
  %v885 = vadd.f32 %v736, %v884
  %v886 = vpop.f32.mrf.mxu0
  %v887 = vpop.f32.mrf.mxu0
  %v888 = vadd.f32 %v736, %v887
  %v889 = vpop.f32.mrf.mxu0
  %890 = vmatprep.mubr.bf16.mxu0 0
  %891 = vmatmul.mubr.bf16.gmra.mxu0 %v708
  %v892 = vpop.f32.mrf.mxu0
  %v893 = vadd.f32 %v736, %v892
  %v894 = vpop.f32.mrf.mxu0
  %v895 = vpop.f32.mrf.mxu0
  %v896 = vadd.f32 %v736, %v895
  %v897 = vpop.f32.mrf.mxu0
  %898 = vmatprep.mubr.bf16.mxu0 0
  %899 = vmatmul.mubr.bf16.gmra.mxu0 %v709
  %v900 = vpop.f32.mrf.mxu0
  %v901 = vadd.f32 %v736, %v900
  %v902 = vpop.f32.mrf.mxu0
  %v903 = vpop.f32.mrf.mxu0
  %v904 = vadd.f32 %v736, %v903
  %v905 = vpop.f32.mrf.mxu0
  %906 = vmatprep.mubr.bf16.mxu0 0
  %907 = vmatmul.mubr.bf16.gmra.mxu0 %v710
  %v908 = vpop.f32.mrf.mxu0
  %v909 = vadd.f32 %v736, %v908
  %v910 = vpop.f32.mrf.mxu0
  %v911 = vpop.f32.mrf.mxu0
  %v912 = vadd.f32 %v736, %v911
  %v913 = vpop.f32.mrf.mxu0
  %914 = vmatprep.mubr.bf16.mxu0 0
  %915 = vmatmul.mubr.bf16.gmra.mxu0 %v711
  %v916 = vpop.f32.mrf.mxu0
  %v917 = vadd.f32 %v736, %v916
  %v918 = vpop.f32.mrf.mxu0
  %v919 = vpop.f32.mrf.mxu0
  %v920 = vadd.f32 %v736, %v919
  %v921 = vpop.f32.mrf.mxu0
  %922 = vmatprep.mubr.bf16.mxu0 0
  %923 = vmatmul.mubr.bf16.gmra.mxu0 %v712
  %v924 = vpop.f32.mrf.mxu0
  %v925 = vadd.f32 %v736, %v924
  %v926 = vpop.f32.mrf.mxu0
  %v927 = vpop.f32.mrf.mxu0
  %v928 = vadd.f32 %v736, %v927
  %v929 = vpop.f32.mrf.mxu0
  %930 = vmatprep.mubr.bf16.mxu0 0
  %931 = vmatmul.mubr.bf16.gmra.mxu0 %v713
  %v932 = vpop.f32.mrf.mxu0
  %v933 = vadd.f32 %v736, %v932
  %v934 = vpop.f32.mrf.mxu0
  %v935 = vpop.f32.mrf.mxu0
  %v936 = vadd.f32 %v736, %v935
  %v937 = vpop.f32.mrf.mxu0
  %938 = vmatprep.mubr.bf16.mxu0 0
  %939 = vmatmul.mubr.bf16.gmra.mxu0 %v714
  %v940 = vpop.f32.mrf.mxu0
  %v941 = vadd.f32 %v736, %v940
  %v942 = vpop.f32.mrf.mxu0
  %v943 = vpop.f32.mrf.mxu0
  %v944 = vadd.f32 %v736, %v943
  %v945 = vpop.f32.mrf.mxu0
  %946 = vdwg.mxu0
  %947 = vmax.xlane.f32.xlu0 %v821
  %v948 = vpop.xlane.xlu0 %947
  %949 = vmax.xlane.f32.xlu0 %v824
  %v950 = vpop.xlane.xlu0 %949
  %951 = vmax.xlane.f32.xlu0 %v829
  %v952 = vpop.xlane.xlu0 %951
  %953 = vmax.xlane.f32.xlu0 %v832
  %v954 = vpop.xlane.xlu0 %953
  %955 = vmax.xlane.f32.xlu0 %v837
  %v956 = vpop.xlane.xlu0 %955
  %957 = vmax.xlane.f32.xlu0 %v840
  %v958 = vpop.xlane.xlu0 %957
  %959 = vmax.xlane.f32.xlu0 %v845
  %v960 = vpop.xlane.xlu0 %959
  %961 = vmax.xlane.f32.xlu0 %v848
  %v962 = vpop.xlane.xlu0 %961
  %963 = vmax.xlane.f32.xlu0 %v853
  %v964 = vpop.xlane.xlu0 %963
  %965 = vmax.xlane.f32.xlu0 %v856
  %v966 = vpop.xlane.xlu0 %965
  %967 = vmax.xlane.f32.xlu0 %v861
  %v968 = vpop.xlane.xlu0 %967
  %969 = vmax.xlane.f32.xlu0 %v864
  %v970 = vpop.xlane.xlu0 %969
  %971 = vmax.xlane.f32.xlu0 %v869
  %v972 = vpop.xlane.xlu0 %971
  %973 = vmax.xlane.f32.xlu0 %v872
  %v974 = vpop.xlane.xlu0 %973
  %975 = vmax.xlane.f32.xlu0 %v877
  %v976 = vpop.xlane.xlu0 %975
  %977 = vmax.xlane.f32.xlu0 %v880
  %v978 = vpop.xlane.xlu0 %977
  %979 = vmax.xlane.f32.xlu0 %v885
  %v980 = vpop.xlane.xlu0 %979
  %981 = vmax.xlane.f32.xlu0 %v888
  %v982 = vpop.xlane.xlu0 %981
  %983 = vmax.xlane.f32.xlu0 %v893
  %v984 = vpop.xlane.xlu0 %983
  %985 = vmax.xlane.f32.xlu0 %v896
  %v986 = vpop.xlane.xlu0 %985
  %987 = vmax.xlane.f32.xlu0 %v901
  %v988 = vpop.xlane.xlu0 %987
  %989 = vmax.xlane.f32.xlu0 %v904
  %v990 = vpop.xlane.xlu0 %989
  %991 = vmax.xlane.f32.xlu0 %v909
  %v992 = vpop.xlane.xlu0 %991
  %993 = vmax.xlane.f32.xlu0 %v912
  %v994 = vpop.xlane.xlu0 %993
  %995 = vmax.xlane.f32.xlu0 %v917
  %v996 = vpop.xlane.xlu0 %995
  %997 = vmax.xlane.f32.xlu0 %v920
  %v998 = vpop.xlane.xlu0 %997
  %999 = vmax.xlane.f32.xlu0 %v925
  %v1000 = vpop.xlane.xlu0 %999
  %1001 = vmax.xlane.f32.xlu0 %v928
  %v1002 = vpop.xlane.xlu0 %1001
  %1003 = vmax.xlane.f32.xlu0 %v933
  %v1004 = vpop.xlane.xlu0 %1003
  %1005 = vmax.xlane.f32.xlu0 %v936
  %v1006 = vpop.xlane.xlu0 %1005
  %1007 = vmax.xlane.f32.xlu0 %v941
  %v1008 = vpop.xlane.xlu0 %1007
  %1009 = vmax.xlane.f32.xlu0 %v944
  %v1010 = vpop.xlane.xlu0 %1009
  %v1011 = vsub.f32 %v821, %v948
  %v1012 = vsub.f32 %v824, %v950
  %v1013 = vsub.f32 %v829, %v952
  %v1014 = vsub.f32 %v832, %v954
  %v1015 = vsub.f32 %v837, %v956
  %v1016 = vsub.f32 %v840, %v958
  %v1017 = vsub.f32 %v845, %v960
  %v1018 = vsub.f32 %v848, %v962
  %v1019 = vsub.f32 %v853, %v964
  %v1020 = vsub.f32 %v856, %v966
  %v1021 = vsub.f32 %v861, %v968
  %v1022 = vsub.f32 %v864, %v970
  %v1023 = vsub.f32 %v869, %v972
  %v1024 = vsub.f32 %v872, %v974
  %v1025 = vsub.f32 %v877, %v976
  %v1026 = vsub.f32 %v880, %v978
  %v1027 = vsub.f32 %v885, %v980
  %v1028 = vsub.f32 %v888, %v982
  %v1029 = vsub.f32 %v893, %v984
  %v1030 = vsub.f32 %v896, %v986
  %v1031 = vsub.f32 %v901, %v988
  %v1032 = vsub.f32 %v904, %v990
  %v1033 = vsub.f32 %v909, %v992
  %v1034 = vsub.f32 %v912, %v994
  %v1035 = vsub.f32 %v917, %v996
  %v1036 = vsub.f32 %v920, %v998
  %v1037 = vsub.f32 %v925, %v1000
  %v1038 = vsub.f32 %v928, %v1002
  %v1039 = vsub.f32 %v933, %v1004
  %v1040 = vsub.f32 %v936, %v1006
  %v1041 = vsub.f32 %v941, %v1008
  %v1042 = vsub.f32 %v944, %v1010
  %v1043 = vmul.f32 %v1011, 1.442695
  %v1044 = vpow.pop %v1043
  %v1045 = vmul.f32 %v1012, 1.442695
  %v1046 = vpow.pop %v1045
  %v1047 = vmul.f32 %v1013, 1.442695
  %v1048 = vpow.pop %v1047
  %v1049 = vmul.f32 %v1014, 1.442695
  %v1050 = vpow.pop %v1049
  %v1051 = vmul.f32 %v1015, 1.442695
  %v1052 = vpow.pop %v1051
  %v1053 = vmul.f32 %v1016, 1.442695
  %v1054 = vpow.pop %v1053
  %v1055 = vmul.f32 %v1017, 1.442695
  %v1056 = vpow.pop %v1055
  %v1057 = vmul.f32 %v1018, 1.442695
  %v1058 = vpow.pop %v1057
  %v1059 = vmul.f32 %v1019, 1.442695
  %v1060 = vpow.pop %v1059
  %v1061 = vmul.f32 %v1020, 1.442695
  %v1062 = vpow.pop %v1061
  %v1063 = vmul.f32 %v1021, 1.442695
  %v1064 = vpow.pop %v1063
  %v1065 = vmul.f32 %v1022, 1.442695
  %v1066 = vpow.pop %v1065
  %v1067 = vmul.f32 %v1023, 1.442695
  %v1068 = vpow.pop %v1067
  %v1069 = vmul.f32 %v1024, 1.442695
  %v1070 = vpow.pop %v1069
  %v1071 = vmul.f32 %v1025, 1.442695
  %v1072 = vpow.pop %v1071
  %v1073 = vmul.f32 %v1026, 1.442695
  %v1074 = vpow.pop %v1073
  %v1075 = vmul.f32 %v1027, 1.442695
  %v1076 = vpow.pop %v1075
  %v1077 = vmul.f32 %v1028, 1.442695
  %v1078 = vpow.pop %v1077
  %v1079 = vmul.f32 %v1029, 1.442695
  %v1080 = vpow.pop %v1079
  %v1081 = vmul.f32 %v1030, 1.442695
  %v1082 = vpow.pop %v1081
  %v1083 = vmul.f32 %v1031, 1.442695
  %v1084 = vpow.pop %v1083
  %v1085 = vmul.f32 %v1032, 1.442695
  %v1086 = vpow.pop %v1085
  %v1087 = vmul.f32 %v1033, 1.442695
  %v1088 = vpow.pop %v1087
  %v1089 = vmul.f32 %v1034, 1.442695
  %v1090 = vpow.pop %v1089
  %v1091 = vmul.f32 %v1035, 1.442695
  %v1092 = vpow.pop %v1091
  %v1093 = vmul.f32 %v1036, 1.442695
  %v1094 = vpow.pop %v1093
  %v1095 = vmul.f32 %v1037, 1.442695
  %v1096 = vpow.pop %v1095
  %v1097 = vmul.f32 %v1038, 1.442695
  %v1098 = vpow.pop %v1097
  %v1099 = vmul.f32 %v1039, 1.442695
  %v1100 = vpow.pop %v1099
  %v1101 = vmul.f32 %v1040, 1.442695
  %v1102 = vpow.pop %v1101
  %v1103 = vmul.f32 %v1041, 1.442695
  %v1104 = vpow.pop %v1103
  %v1105 = vmul.f32 %v1042, 1.442695
  %v1106 = vpow.pop %v1105
  %1107 = vadd.xlane.f32.xlu0 %v1044
  %v1108 = vpop.xlane.xlu0 %1107
  %1109 = vadd.xlane.f32.xlu0 %v1046
  %v1110 = vpop.xlane.xlu0 %1109
  %1111 = vadd.xlane.f32.xlu0 %v1048
  %v1112 = vpop.xlane.xlu0 %1111
  %1113 = vadd.xlane.f32.xlu0 %v1050
  %v1114 = vpop.xlane.xlu0 %1113
  %1115 = vadd.xlane.f32.xlu0 %v1052
  %v1116 = vpop.xlane.xlu0 %1115
  %1117 = vadd.xlane.f32.xlu0 %v1054
  %v1118 = vpop.xlane.xlu0 %1117
  %1119 = vadd.xlane.f32.xlu0 %v1056
  %v1120 = vpop.xlane.xlu0 %1119
  %1121 = vadd.xlane.f32.xlu0 %v1058
  %v1122 = vpop.xlane.xlu0 %1121
  %1123 = vadd.xlane.f32.xlu0 %v1060
  %v1124 = vpop.xlane.xlu0 %1123
  %1125 = vadd.xlane.f32.xlu0 %v1062
  %v1126 = vpop.xlane.xlu0 %1125
  %1127 = vadd.xlane.f32.xlu0 %v1064
  %v1128 = vpop.xlane.xlu0 %1127
  %1129 = vadd.xlane.f32.xlu0 %v1066
  %v1130 = vpop.xlane.xlu0 %1129
  %1131 = vadd.xlane.f32.xlu0 %v1068
  %v1132 = vpop.xlane.xlu0 %1131
  %1133 = vadd.xlane.f32.xlu0 %v1070
  %v1134 = vpop.xlane.xlu0 %1133
  %1135 = vadd.xlane.f32.xlu0 %v1072
  %v1136 = vpop.xlane.xlu0 %1135
  %1137 = vadd.xlane.f32.xlu0 %v1074
  %v1138 = vpop.xlane.xlu0 %1137
  %1139 = vadd.xlane.f32.xlu0 %v1076
  %v1140 = vpop.xlane.xlu0 %1139
  %1141 = vadd.xlane.f32.xlu0 %v1078
  %v1142 = vpop.xlane.xlu0 %1141
  %1143 = vadd.xlane.f32.xlu0 %v1080
  %v1144 = vpop.xlane.xlu0 %1143
  %1145 = vadd.xlane.f32.xlu0 %v1082
  %v1146 = vpop.xlane.xlu0 %1145
  %1147 = vadd.xlane.f32.xlu0 %v1084
  %v1148 = vpop.xlane.xlu0 %1147
  %1149 = vadd.xlane.f32.xlu0 %v1086
  %v1150 = vpop.xlane.xlu0 %1149
  %1151 = vadd.xlane.f32.xlu0 %v1088
  %v1152 = vpop.xlane.xlu0 %1151
  %1153 = vadd.xlane.f32.xlu0 %v1090
  %v1154 = vpop.xlane.xlu0 %1153
  %1155 = vadd.xlane.f32.xlu0 %v1092
  %v1156 = vpop.xlane.xlu0 %1155
  %1157 = vadd.xlane.f32.xlu0 %v1094
  %v1158 = vpop.xlane.xlu0 %1157
  %1159 = vadd.xlane.f32.xlu0 %v1096
  %v1160 = vpop.xlane.xlu0 %1159
  %1161 = vadd.xlane.f32.xlu0 %v1098
  %v1162 = vpop.xlane.xlu0 %1161
  %1163 = vadd.xlane.f32.xlu0 %v1100
  %v1164 = vpop.xlane.xlu0 %1163
  %1165 = vadd.xlane.f32.xlu0 %v1102
  %v1166 = vpop.xlane.xlu0 %1165
  %1167 = vadd.xlane.f32.xlu0 %v1104
  %v1168 = vpop.xlane.xlu0 %1167
  %1169 = vadd.xlane.f32.xlu0 %v1106
  %v1170 = vpop.xlane.xlu0 %1169
  %v1171 = vrcp.pop %v1108
  %v1172 = vrcp.pop %v1110
  %v1173 = vrcp.pop %v1112
  %v1174 = vrcp.pop %v1114
  %v1175 = vrcp.pop %v1116
  %v1176 = vrcp.pop %v1118
  %v1177 = vrcp.pop %v1120
  %v1178 = vrcp.pop %v1122
  %v1179 = vrcp.pop %v1124
  %v1180 = vrcp.pop %v1126
  %v1181 = vrcp.pop %v1128
  %v1182 = vrcp.pop %v1130
  %v1183 = vrcp.pop %v1132
  %v1184 = vrcp.pop %v1134
  %v1185 = vrcp.pop %v1136
  %v1186 = vrcp.pop %v1138
  %v1187 = vrcp.pop %v1140
  %v1188 = vrcp.pop %v1142
  %v1189 = vrcp.pop %v1144
  %v1190 = vrcp.pop %v1146
  %v1191 = vrcp.pop %v1148
  %v1192 = vrcp.pop %v1150
  %v1193 = vrcp.pop %v1152
  %v1194 = vrcp.pop %v1154
  %v1195 = vrcp.pop %v1156
  %v1196 = vrcp.pop %v1158
  %v1197 = vrcp.pop %v1160
  %v1198 = vrcp.pop %v1162
  %v1199 = vrcp.pop %v1164
  %v1200 = vrcp.pop %v1166
  %v1201 = vrcp.pop %v1168
  %v1202 = vrcp.pop %v1170
  %v1203 = vmul.f32 %v1044, %v1171
  %v1204 = vmul.f32 %v1046, %v1172
  %v1205 = vmul.f32 %v1048, %v1173
  %v1206 = vmul.f32 %v1050, %v1174
  %v1207 = vmul.f32 %v1052, %v1175
  %v1208 = vmul.f32 %v1054, %v1176
  %v1209 = vmul.f32 %v1056, %v1177
  %v1210 = vmul.f32 %v1058, %v1178
  %v1211 = vmul.f32 %v1060, %v1179
  %v1212 = vmul.f32 %v1062, %v1180
  %v1213 = vmul.f32 %v1064, %v1181
  %v1214 = vmul.f32 %v1066, %v1182
  %v1215 = vmul.f32 %v1068, %v1183
  %v1216 = vmul.f32 %v1070, %v1184
  %v1217 = vmul.f32 %v1072, %v1185
  %v1218 = vmul.f32 %v1074, %v1186
  %v1219 = vmul.f32 %v1076, %v1187
  %v1220 = vmul.f32 %v1078, %v1188
  %v1221 = vmul.f32 %v1080, %v1189
  %v1222 = vmul.f32 %v1082, %v1190
  %v1223 = vmul.f32 %v1084, %v1191
  %v1224 = vmul.f32 %v1086, %v1192
  %v1225 = vmul.f32 %v1088, %v1193
  %v1226 = vmul.f32 %v1090, %v1194
  %v1227 = vmul.f32 %v1092, %v1195
  %v1228 = vmul.f32 %v1094, %v1196
  %v1229 = vmul.f32 %v1096, %v1197
  %v1230 = vmul.f32 %v1098, %v1198
  %v1231 = vmul.f32 %v1100, %v1199
  %v1232 = vmul.f32 %v1102, %v1200
  %v1233 = vmul.f32 %v1104, %v1201
  %v1234 = vmul.f32 %v1106, %v1202
  %1235 = vst [vmem:[%s7] sm:$0xff] %v1203
  %1236 = vst [vmem:[%s7 + $0x8] sm:$0xff] %v1204
  %1237 = vst [vmem:[%s7 + $0x10] sm:$0xff] %v1205
  %1238 = vst [vmem:[%s7 + $0x18] sm:$0xff] %v1206
  %1239 = vst [vmem:[%s7 + $0x20] sm:$0xff] %v1207
  %1240 = vst [vmem:[%s7 + $0x28] sm:$0xff] %v1208
  %1241 = vst [vmem:[%s7 + $0x30] sm:$0xff] %v1209
  %1242 = vst [vmem:[%s7 + $0x38] sm:$0xff] %v1210
  %1243 = vst [vmem:[%s7 + $0x40] sm:$0xff] %v1211
  %1244 = vst [vmem:[%s7 + $0x48] sm:$0xff] %v1212
  %1245 = vst [vmem:[%s7 + $0x50] sm:$0xff] %v1213
  %1246 = vst [vmem:[%s7 + $0x58] sm:$0xff] %v1214
  %1247 = vst [vmem:[%s7 + $0x60] sm:$0xff] %v1215
  %1248 = vst [vmem:[%s7 + $0x68] sm:$0xff] %v1216
  %1249 = vst [vmem:[%s7 + $0x70] sm:$0xff] %v1217
  %1250 = vst [vmem:[%s7 + $0x78] sm:$0xff] %v1218
  %1251 = vst [vmem:[%s7 + $0x80] sm:$0xff] %v1219
  %1252 = vst [vmem:[%s7 + $0x88] sm:$0xff] %v1220
  %1253 = vst [vmem:[%s7 + $0x90] sm:$0xff] %v1221
  %1254 = vst [vmem:[%s7 + $0x98] sm:$0xff] %v1222
  %1255 = vst [vmem:[%s7 + $0xa0] sm:$0xff] %v1223
  %1256 = vst [vmem:[%s7 + $0xa8] sm:$0xff] %v1224
  %1257 = vst [vmem:[%s7 + $0xb0] sm:$0xff] %v1225
  %1258 = vst [vmem:[%s7 + $0xb8] sm:$0xff] %v1226
  %1259 = vst [vmem:[%s7 + $0xc0] sm:$0xff] %v1227
  %1260 = vst [vmem:[%s7 + $0xc8] sm:$0xff] %v1228
  %1261 = vst [vmem:[%s7 + $0xd0] sm:$0xff] %v1229
  %1262 = vst [vmem:[%s7 + $0xd8] sm:$0xff] %v1230
  %1263 = vst [vmem:[%s7 + $0xe0] sm:$0xff] %v1231
  %1264 = vst [vmem:[%s7 + $0xe8] sm:$0xff] %v1232
  %1265 = vst [vmem:[%s7 + $0xf0] sm:$0xff] %v1233
  %1266 = vst [vmem:[%s7 + $0xf8] sm:$0xff] %v1234
  // Predicated region
  $region30: #{_mlp_forward_impl.1} parent=0 // pred_check
    _
  $region31: #{_mlp_forward_impl.1} parent=0 // pred_check_branch
    %1268 = sbr.rel (0) target = $region33
  $region32: #{_mlp_forward_impl.1} parent=0 // pred_region
    _
  $region33: #{_mlp_forward_impl.1} parent=0 // pred_fallthru
    _
  // Predicated region
  $region34: #{_mlp_forward_impl.1} parent=0 // pred_check
    _
  $region35: #{_mlp_forward_impl.1} parent=0 // pred_check_branch
    %1270 = sbr.rel (0) target = $region37
  $region36: #{_mlp_forward_impl.1} parent=0 // pred_region
    _
  $region37: #{_mlp_forward_impl.1} parent=0 // pred_fallthru
    _

</llo_original>
